<compile_context>
chip_gen: v7x
topology: tpu7x:2x2x1
jax: 0.10.0
libtpu: 0.0.40
codegen_flags: <defaults>
</compile_context>

<pallas_src>
import functools
from typing import Any, Dict, List, Optional, Tuple

import numpy as np
import jax
import jax.numpy as jnp
from jax import lax
from jax.experimental import pallas as pl
from jax.experimental.pallas import tpu as pltpu


_PALLAS_MIN_PIXELS = 1024   # below this a pallas_call is pure launch/step overhead
_MAX_TILE_ROWS = 512        # 512x128 f32 = 256 KB per buffer


# -----------------------------------------------------------------------------
# small helpers
# -----------------------------------------------------------------------------
def _round_up(x: int, m: int) -> int:
    return ((x + m - 1) // m) * m


def _cdiv(a: int, b: int) -> int:
    return -(-a // b)


def _plan_tile_rows(rows: int) -> int:
    return rows if rows <= _MAX_TILE_ROWS else _MAX_TILE_ROWS


def _to_lane_dense(t2: jnp.ndarray) -> Tuple[jnp.ndarray, int]:
    """[B, P] -> [B, rows, 128]; pads (with -1.0) only when P % 128 != 0."""
    B, P = t2.shape
    rows = _cdiv(P, 128)
    pad = rows * 128 - P
    if pad:
        t2 = jnp.pad(t2, ((0, 0), (0, pad)), constant_values=-1.0)
    return t2.reshape(B, rows, 128), rows


def _bilinear_resize_align_corners(x: jnp.ndarray, out_h: int, out_w: int) -> jnp.ndarray:
    """x: [B, H, W] -> [B, out_h, out_w]; bilinear, align_corners=True (F.interpolate)."""
    B, H, W = x.shape
    if (H, W) == (out_h, out_w):
        return x
    x = x.astype(jnp.float32)
    ys = jnp.linspace(0.0, H - 1.0, out_h) if out_h > 1 else jnp.zeros((1,), jnp.float32)
    xs = jnp.linspace(0.0, W - 1.0, out_w) if out_w > 1 else jnp.zeros((1,), jnp.float32)
    y0 = jnp.clip(jnp.floor(ys), 0, H - 1).astype(jnp.int32)
    y1 = jnp.clip(y0 + 1, 0, H - 1)
    x0 = jnp.clip(jnp.floor(xs), 0, W - 1).astype(jnp.int32)
    x1 = jnp.clip(x0 + 1, 0, W - 1)
    wy = (ys - y0.astype(jnp.float32))[None, :, None]
    wx = (xs - x0.astype(jnp.float32))[None, None, :]
    r0 = jnp.take(x, y0, axis=1)
    r1 = jnp.take(x, y1, axis=1)
    v00 = jnp.take(r0, x0, axis=2)
    v01 = jnp.take(r0, x1, axis=2)
    v10 = jnp.take(r1, x0, axis=2)
    v11 = jnp.take(r1, x1, axis=2)
    top = v00 * (1.0 - wx) + v01 * wx
    bot = v10 * (1.0 - wx) + v11 * wx
    return top * (1.0 - wy) + bot * wy


# -----------------------------------------------------------------------------
# Pallas kernel 1: per-batch histogram (torch.histc semantics) + int8 idx handoff
# -----------------------------------------------------------------------------
def _hist_kernel(t_ref, h_ref, idx_ref, acc_ref, *,
                 num_bins: int, max_height: float, nbp: int,
                 valid_rows: int, tile_rows: int, tiles_per_part: int):
    p = pl.program_id(1)
    t = pl.program_id(2)

    @pl.when(t == 0)
    def _init():
        acc_ref[...] = jnp.zeros_like(acc_ref)

    scale = float(num_bins) / float(max_height)

    # (a) int8 clamped-bin-index handoff for the gather kernel (full aligned block store).
    x_all = t_ref[0].astype(jnp.float32)                            # [tile_rows, 128]
    idx_all = jnp.clip((x_all * scale).astype(jnp.int32), 0, num_bins - 1)
    idx_ref[0] = idx_all.astype(jnp.int8)

    # (b) per-lane histogram accumulated over 8-row groups (fori_loop bounds live ranges).
    bins = lax.broadcasted_iota(jnp.int32, (nbp, 128), 0)
    row8 = lax.broadcasted_iota(jnp.int32, (8, 128), 0)
    row0 = (p * tiles_per_part + t) * tile_rows                     # logical (unclamped) origin
    n_groups = _cdiv(tile_rows, 8)

    def group_body(g, part):
        base = pl.multiple_of(g * 8, 8)
        xg = t_ref[0, pl.ds(base, 8), :].astype(jnp.float32)        # [8, 128]
        idxg = jnp.minimum((xg * scale).astype(jnp.int32), num_bins - 1)
        valid = (xg >= 0.0) & (xg <= max_height) & ((row0 + base + row8) < valid_rows)
        idxg = jnp.where(valid, idxg, -1)                           # out-of-range excluded (histc)
        for r in range(8):                                          # small static micro-loop
            part = part + (idxg[r:r + 1, :] == bins).astype(jnp.float32)
        return part

    part = lax.fori_loop(0, n_groups, group_body, jnp.zeros((nbp, 128), jnp.float32))
    acc_ref[...] += part

    @pl.when(t == pl.num_programs(2) - 1)
    def _finalize():
        h_ref[0, 0] = jnp.sum(acc_ref[...], axis=1, keepdims=True)  # [nbp, 1]


def _histogram_pallas(t2: jnp.ndarray, *, num_bins: int, max_height: float
                      ) -> Tuple[jnp.ndarray, jnp.ndarray]:
    """t2: [B, P] heights -> ([B, num_bins] f32 counts, [B, rows, 128] int8 bin idx)."""
    B, _ = t2.shape
    t3, rows = _to_lane_dense(t2.astype(jnp.float32))
    tile_rows = _plan_tile_rows(rows)
    n_tiles = _cdiv(rows, tile_rows)
    # v7x: keep both TensorCores busy when batch alone cannot (B == 1).
    npar = 2 if (B == 1 and n_tiles >= 2) else 1
    tiles_per_part = _cdiv(n_tiles, npar)
    nbp = _round_up(num_bins, 8)

    if npar == 1:
        def tile_idx(p, t):
            return t
    else:
        def tile_idx(p, t):
            # clamp the duplicated trailing tile; the kernel's global-row mask excludes it
            return jnp.minimum(p * tiles_per_part + t, n_tiles - 1)

    kernel = functools.partial(
        _hist_kernel, num_bins=num_bins, max_height=float(max_height), nbp=nbp,
        valid_rows=rows, tile_rows=tile_rows, tiles_per_part=tiles_per_part)

    hist, idx8 = pl.pallas_call(
        kernel,
        grid=(B, npar, tiles_per_part),
        in_specs=[pl.BlockSpec((1, tile_rows, 128),
                               lambda b, p, t: (b, tile_idx(p, t), 0))],
        out_specs=[pl.BlockSpec((1, 1, nbp, 1), lambda b, p, t: (b, p, 0, 0)),
                   pl.BlockSpec((1, tile_rows, 128),
                                lambda b, p, t: (b, tile_idx(p, t), 0))],
        out_shape=[jax.ShapeDtypeStruct((B, npar, nbp, 1), jnp.float32),
                   jax.ShapeDtypeStruct((B, rows, 128), jnp.int8)],
        scratch_shapes=[pltpu.VMEM((nbp, 128), jnp.float32)],
        compiler_params=pltpu.CompilerParams(
            dimension_semantics=("parallel", "parallel", "arbitrary")),
    )(t3)
    return hist[:, :, :num_bins, 0].sum(axis=1), idx8


def _histogram_jnp(t2: jnp.ndarray, *, num_bins: int, max_height: float) -> jnp.ndarray:
    x = t2.astype(jnp.float32)
    scale = float(num_bins) / float(max_height)
    idx = jnp.minimum((x * scale).astype(jnp.int32), num_bins - 1)
    valid = (x >= 0.0) & (x <= max_height)
    idx = jnp.where(valid, idx, -1)
    onehot = (idx[:, :, None] == jnp.arange(num_bins)[None, None, :]).astype(jnp.float32)
    return onehot.sum(axis=1)


# -----------------------------------------------------------------------------
# Pallas kernel 2: bin-weight -> pixel-weight gather
# -----------------------------------------------------------------------------
def _gather_take_kernel(bw_ref, v_ref, o_ref, *, num_bins: int, max_height: float,
                        input_is_idx: bool):
    if input_is_idx:
        idx = v_ref[0].astype(jnp.int32)
    else:
        x = v_ref[0].astype(jnp.float32)
        idx = (x * (float(num_bins) / float(max_height))).astype(jnp.int32)
    idx = jnp.clip(idx, 0, num_bins - 1)
    table = jnp.broadcast_to(bw_ref[0], idx.shape)          # weight row replicated to all sublanes
    o_ref[0] = jnp.take_along_axis(table, idx, axis=-1)     # hardware lane gather (XLU)


def _gather_select_kernel(bw_ref, v_ref, o_ref, *, num_bins: int, max_height: float,
                          input_is_idx: bool):
    if input_is_idx:
        idx = v_ref[0].astype(jnp.int32)
    else:
        x = v_ref[0].astype(jnp.float32)
        idx = (x * (float(num_bins) / float(max_height))).astype(jnp.int32)
    idx = jnp.clip(idx, 0, num_bins - 1)
    bw_row = bw_ref[0]                                       # (1, 128)
    lane = lax.broadcasted_iota(jnp.int32, (1, 128), 1)
    res = jnp.zeros(idx.shape, jnp.float32)
    for k in range(num_bins):                                # fallback select chain
        w_k = jnp.sum(jnp.where(lane == k, bw_row, 0.0), axis=-1, keepdims=True)  # (1,1)
        res = jnp.where(idx == k, w_k, res)
    o_ref[0] = res


_TAKE_GATHER_OK: Optional[bool] = None


def _take_gather_supported() -> bool:
    """One-time probe: does jnp.take_along_axis lower to a TPU lane gather in Pallas?"""
    global _TAKE_GATHER_OK
    if _TAKE_GATHER_OK is not None:
        return _TAKE_GATHER_OK
    try:
        def probe(bw_ref, idx_ref, o_ref):
            idx = jnp.clip(idx_ref[0].astype(jnp.int32), 0, 127)
            table = jnp.broadcast_to(bw_ref[0], idx.shape)
            o_ref[0] = jnp.take_along_axis(table, idx, axis=-1)

        bw = (jnp.arange(128, dtype=jnp.float32) * 0.5 + 1.0).reshape(1, 1, 128)
        idx = (jnp.arange(8 * 128, dtype=jnp.int32) % 50).reshape(1, 8, 128)
        out = pl.pallas_call(
            probe,
            grid=(1,),
            in_specs=[pl.BlockSpec((1, 1, 128), lambda b: (b, 0, 0)),
                      pl.BlockSpec((1, 8, 128), lambda b: (b, 0, 0))],
            out_specs=pl.BlockSpec((1, 8, 128), lambda b: (b, 0, 0)),
            out_shape=jax.ShapeDtypeStruct((1, 8, 128), jnp.float32),
        )(bw, idx.astype(jnp.int8))
        ref = bw[0, 0, :][idx[0]]
        _TAKE_GATHER_OK = bool(jnp.allclose(out[0], ref))
    except Exception:
        _TAKE_GATHER_OK = False
    return _TAKE_GATHER_OK


def _map_weights_pallas(vals3: jnp.ndarray, bin_weights: jnp.ndarray, *,
                        num_bins: int, max_height: float,
                        input_is_idx: bool) -> jnp.ndarray:
    """vals3: [B, rows, 128] (int8 bin idx or raw heights); returns [B, rows, 128] f32."""
    global _TAKE_GATHER_OK
    B, rows, _ = vals3.shape
    tile_rows = _plan_tile_rows(rows)
    n_tiles = _cdiv(rows, tile_rows)

    bw3 = jnp.zeros((B, 1, 128), jnp.float32)
    bw3 = bw3.at[:, 0, :num_bins].set(bin_weights.astype(jnp.float32))

    def _call(kernel_fn):
        kernel = functools.partial(kernel_fn, num_bins=num_bins,
                                   max_height=float(max_height), input_is_idx=input_is_idx)
        return pl.pallas_call(
            kernel,
            grid=(B, n_tiles),
            in_specs=[pl.BlockSpec((1, 1, 128), lambda b, t: (b, 0, 0)),
                      pl.BlockSpec((1, tile_rows, 128), lambda b, t: (b, t, 0))],
            out_specs=pl.BlockSpec((1, tile_rows, 128), lambda b, t: (b, t, 0)),
            out_shape=jax.ShapeDtypeStruct((B, rows, 128), jnp.float32),
            compiler_params=pltpu.CompilerParams(
                dimension_semantics=("parallel", "parallel")),
        )(bw3, vals3)

    if num_bins <= 128 and _take_gather_supported():
        try:
            return _call(_gather_take_kernel)
        except Exception:
            _TAKE_GATHER_OK = False      # fall through to select-chain kernel
    return _call(_gather_select_kernel)


def _map_weights_jnp(t2: jnp.ndarray, bin_weights: jnp.ndarray, *,
                     num_bins: int, max_height: float) -> jnp.ndarray:
    x = t2.astype(jnp.float32)
    scale = float(num_bins) / float(max_height)
    idx = jnp.clip((x * scale).astype(jnp.int32), 0, num_bins - 1)
    return jnp.take_along_axis(bin_weights.astype(jnp.float32), idx, axis=1)


# -----------------------------------------------------------------------------
# LDS kernel windows (host-side numpy, matching scipy semantics)
# -----------------------------------------------------------------------------
def _gaussian_lds_window(ks: int, sigma: float) -> np.ndarray:
    half = (ks - 1) // 2
    base = np.zeros(ks, np.float64)
    base[half] = 1.0
    radius = int(4.0 * sigma + 0.5)
    t = np.arange(-radius, radius + 1, dtype=np.float64)
    phi = np.exp(-0.5 * (t / sigma) ** 2)
    phi /= phi.sum()
    n = ks

    def reflect(j: int) -> int:
        m = j % (2 * n)
        return m if m < n else 2 * n - 1 - m

    out = np.zeros(n, np.float64)
    for i in range(n):
        acc = 0.0
        for j in range(-radius, radius + 1):
            acc += phi[j + radius] * base[reflect(i + j)]
        out[i] = acc
    return out / out.max()


def _triang_window(ks: int) -> np.ndarray:
    half = (ks + 1) // 2
    n = np.arange(1, half + 1, dtype=np.float64)
    if ks % 2 == 1:
        w = 2.0 * n / (ks + 1.0)
        return np.concatenate([w, w[-2::-1]])
    w = (2.0 * n - 1.0) / ks
    return np.concatenate([w, w[::-1]])


def _laplace_window(ks: int, sigma: float) -> np.ndarray:
    half = (ks - 1) // 2
    lap = lambda v: np.exp(-abs(v) / sigma) / (2.0 * sigma)
    w = np.array([lap(v) for v in range(-half, half + 1)], np.float64)
    return w / w.max()


# -----------------------------------------------------------------------------
# tiny jnp glue: weight-predictor MLP, KL divergence
# -----------------------------------------------------------------------------
def _init_linear(key, fan_in: int, fan_out: int):
    kw, kb = jax.random.split(key)
    bound = 1.0 / float(np.sqrt(fan_in))
    w = jax.random.uniform(kw, (fan_out, fan_in), jnp.float32, -bound, bound)
    b = jax.random.uniform(kb, (fan_out,), jnp.float32, -bound, bound)
    return w, b


def _apply_weight_predictor(params, x):
    (w1, b1), (w2, b2), (w3, b3) = params
    h = jax.nn.relu(x @ w1.T + b1)
    h = jax.nn.relu(h @ w2.T + b2)
    return jax.nn.softplus(h @ w3.T + b3)          # [B, 1]


def _kl_div_batchmean(log_p: jnp.ndarray, q: jnp.ndarray) -> jnp.ndarray:
    pointwise = jnp.where(q > 0.0, q * jnp.log(q), 0.0) - q * log_p
    return jnp.sum(pointwise) / q.shape[0]


# -----------------------------------------------------------------------------
# Module port
# -----------------------------------------------------------------------------
class MultiScaleHeightDistributionAnalyzer:
    def __init__(self,
                 num_height_bins: int = 50,
                 max_height: float = 100.0,
                 scales: Optional[List[str]] = None,
                 lds_kernel: str = 'gaussian',
                 lds_ks: int = 5,
                 lds_sigma: float = 2.0,
                 param_key: Optional[jax.Array] = None,
                 training: bool = True):
        assert lds_kernel in ['gaussian', 'triang', 'laplace']
        self.num_height_bins = num_height_bins
        self.max_height = float(max_height)
        self.scales = scales or ['scale_1', 'scale_2', 'scale_3', 'scale_4']
        self.lds_kernel = lds_kernel
        self.lds_ks = lds_ks
        self.lds_sigma = lds_sigma
        self.momentum = 0.9
        self.training = training

        self.height_bins = jnp.linspace(0.0, self.max_height, num_height_bins + 1)
        self._lds_window_np = self._get_lds_kernel_window()
        self.lds_kernel_window = jnp.asarray(self._lds_window_np, jnp.float32)
        self.consistency_weight = jnp.float32(0.1)

        if param_key is None:
            param_key = jax.random.PRNGKey(0)
        self.weight_predictors = {}
        for i, scale in enumerate(self.scales):
            k = jax.random.fold_in(param_key, i)
            k1, k2, k3 = jax.random.split(k, 3)
            self.weight_predictors[scale] = (
                _init_linear(k1, num_height_bins, 64),
                _init_linear(k2, 64, 32),
                _init_linear(k3, 32, 1),
            )
        self.running_dist = {s: jnp.ones(num_height_bins, jnp.float32) / num_height_bins
                             for s in self.scales}

    def _get_lds_kernel_window(self) -> np.ndarray:
        if self.lds_kernel == 'gaussian':
            return _gaussian_lds_window(self.lds_ks, self.lds_sigma)
        if self.lds_kernel == 'triang':
            return _triang_window(self.lds_ks)
        return _laplace_window(self.lds_ks, self.lds_sigma)

    # --- distribution statistics --------------------------------------------
    def _distribution_and_indices(self, height_values: jnp.ndarray
                                  ) -> Tuple[jnp.ndarray, Optional[jnp.ndarray]]:
        B = height_values.shape[0]
        t2 = height_values.reshape(B, -1)
        if t2.shape[1] >= _PALLAS_MIN_PIXELS:
            hist, idx8 = _histogram_pallas(t2, num_bins=self.num_height_bins,
                                           max_height=self.max_height)
        else:
            hist = _histogram_jnp(t2, num_bins=self.num_height_bins,
                                  max_height=self.max_height)
            idx8 = None
        hist_sum = hist.sum(axis=1, keepdims=True)
        uniform = jnp.full_like(hist, 1.0 / self.num_height_bins)
        dist = jnp.where(hist_sum > 1e-8, hist / jnp.maximum(hist_sum, 1e-8), uniform)
        return dist, idx8

    def compute_empirical_distribution(self, height_values: jnp.ndarray) -> jnp.ndarray:
        return self._distribution_and_indices(height_values)[0]

    def apply_label_distribution_smoothing(self, empirical_dist: jnp.ndarray) -> jnp.ndarray:
        # scipy.ndimage.convolve1d(..., mode='constant') == correlate with flipped kernel
        w = np.asarray(self._lds_window_np)[::-1]
        half = (self.lds_ks - 1) // 2
        padded = jnp.pad(empirical_dist, ((0, 0), (half, half)))
        out = jnp.zeros_like(empirical_dist)
        for j in range(self.lds_ks):
            out = out + float(w[j]) * padded[:, j:j + self.num_height_bins]
        return out

    def compute_effective_weights(self, smoothed_dist: jnp.ndarray, scale_name: str) -> jnp.ndarray:
        beta = 0.999
        total_samples = 10000.0
        counts = smoothed_dist * total_samples
        effective = (1.0 - jnp.power(beta, counts)) / (1.0 - beta + 1e-8)
        base_w = 1.0 / (effective + 1e-8)
        centers = (self.height_bins[:-1] + self.height_bins[1:]) * 0.5
        difficulty = jax.nn.sigmoid((centers - 20.0) / 10.0)
        difficulty_weights = base_w * difficulty[None, :]
        dyn = _apply_weight_predictor(self.weight_predictors[scale_name], smoothed_dist)  # [B,1]
        final = difficulty_weights * dyn
        return final / (final.mean(axis=1, keepdims=True) + 1e-8)

    def map_weights_to_pixels(self, targets_resized: jnp.ndarray,
                              bin_weights: jnp.ndarray,
                              idx8: Optional[jnp.ndarray] = None) -> jnp.ndarray:
        B, H, W = targets_resized.shape
        P = H * W
        if P >= _PALLAS_MIN_PIXELS:
            if idx8 is not None:
                pw3 = _map_weights_pallas(idx8, bin_weights, num_bins=self.num_height_bins,
                                          max_height=self.max_height, input_is_idx=True)
            else:
                vals3, _ = _to_lane_dense(targets_resized.reshape(B, P).astype(jnp.float32))
                pw3 = _map_weights_pallas(vals3, bin_weights, num_bins=self.num_height_bins,
                                          max_height=self.max_height, input_is_idx=False)
            rows = pw3.shape[1]
            pw = pw3.reshape(B, rows * 128)
            if rows * 128 != P:
                pw = pw[:, :P]
            return pw.reshape(B, H, W)
        pw = _map_weights_jnp(targets_resized.reshape(B, P), bin_weights,
                              num_bins=self.num_height_bins, max_height=self.max_height)
        return pw.reshape(B, H, W)

    # --- forward --------------------------------------------------------------
    def __call__(self, predictions: Dict[str, jnp.ndarray],
                 targets: jnp.ndarray) -> Tuple[Dict[str, jnp.ndarray], Dict[str, Any]]:
        pixel_weights: Dict[str, jnp.ndarray] = {}
        scale_distributions: Dict[str, jnp.ndarray] = {}
        scale_weights: Dict[str, jnp.ndarray] = {}

        for scale_name, pred in predictions.items():
            if scale_name not in self.scales:
                continue
            if targets.shape != pred.shape:
                targets_resized = _bilinear_resize_align_corners(
                    targets, pred.shape[-2], pred.shape[-1])
            else:
                targets_resized = targets

            empirical_dist, idx8 = self._distribution_and_indices(targets_resized)
            scale_distributions[scale_name] = empirical_dist
            smoothed_dist = self.apply_label_distribution_smoothing(empirical_dist)
            bin_weights = self.compute_effective_weights(smoothed_dist, scale_name)
            scale_weights[scale_name] = bin_weights
            pixel_weights[scale_name] = self.map_weights_to_pixels(
                targets_resized, bin_weights, idx8=idx8)

            if self.training:
                # TODO(synk): Python-side buffer mutation; would leak tracers under jax.jit.
                global_dist = empirical_dist.mean(axis=0)
                self.running_dist[scale_name] = (
                    self.momentum * self.running_dist[scale_name]
                    + (1.0 - self.momentum) * global_dist)

        consistency_loss = jnp.float32(0.0)
        dists = list(scale_distributions.values())
        if len(dists) > 1:
            for i in range(len(dists)):
                for j in range(i + 1, len(dists)):
                    consistency_loss = consistency_loss + _kl_div_batchmean(
                        jnp.log(dists[i] + 1e-8), dists[j])
            consistency_loss = consistency_loss * self.consistency_weight

        analysis_info = {
            'scale_distributions': scale_distributions,
            'scale_weights': scale_weights,
            'consistency_loss': consistency_loss,
            'total_pixels': int(targets.size),
            # kept as device scalars (no .item()) to avoid blocking host round-trips
            'high_building_ratio': (targets > 20.0).astype(jnp.float32).mean(),
            'mean_height': targets.mean(),
            'max_height': targets.max(),
        }
        return pixel_weights, analysis_info


# -----------------------------------------------------------------------------
# Demo
# -----------------------------------------------------------------------------
if __name__ == "__main__":
    key = jax.random.PRNGKey(0)
    k_t, k1, k2, k3, k4, k_params = jax.random.split(key, 6)

    B = 2
    # building-height-like targets (full resolution 64x64) in [0, 60] m
    targets = jax.random.uniform(k_t, (B, 64, 64), jnp.float32, 0.0, 60.0)

    # multi-scale predictions (only their shapes drive the per-scale resizing)
    predictions = {
        'scale_1': jax.random.uniform(k1, (B, 8, 8), jnp.float32, 0.0, 60.0),
        'scale_2': jax.random.uniform(k2, (B, 16, 16), jnp.float32, 0.0, 60.0),
        'scale_3': jax.random.uniform(k3, (B, 32, 32), jnp.float32, 0.0, 60.0),  # Pallas path
        'scale_4': jax.random.uniform(k4, (B, 64, 64), jnp.float32, 0.0, 60.0),  # Pallas path
    }

    analyzer = MultiScaleHeightDistributionAnalyzer(param_key=k_params)
    pixel_weights, info = analyzer(predictions, targets)

    # single device sync at the very end (no per-scale host round-trips)
    for s in ('scale_1', 'scale_2', 'scale_3', 'scale_4'):
        jax.block_until_ready(pixel_weights[s])
    jax.block_until_ready(info['consistency_loss'])
    print("KERNEL_OK")
</pallas_src>

<mosaic_0001>
module attributes {stable_mosaic.version = 11 : i64} {
  func.func @_hist_kernel(%arg0: i32, %arg1: i32, %arg2: i32, %arg3: memref<1x8x128xf32, #tpu.memory_space<vmem>>, %arg4: memref<1x1x56x1xf32, #tpu.memory_space<vmem>>, %arg5: memref<1x8x128xi8, #tpu.memory_space<vmem>>, %arg6: memref<56x128xf32, #tpu.memory_space<vmem>>) attributes {dimension_semantics = [#tpu.dimension_semantics<parallel>, #tpu.dimension_semantics<parallel>, #tpu.dimension_semantics<arbitrary>], iteration_bounds = array<i64: 2, 1, 1>, scalar_prefetch = 0 : i64, scratch_operands = 1 : i64, tpu.core_type = #tpu.core_type<tc>, window_params = [{transform_indices = @transform_0, window_bounds = array<i64: 1, 8, 128>}, {transform_indices = @transform_1, window_bounds = array<i64: 1, 1, 56, 1>}, {transform_indices = @transform_2, window_bounds = array<i64: 1, 8, 128>}]} {
    %c0_i32 = arith.constant 0 : i32
    %0 = arith.cmpi eq, %arg2, %c0_i32 : i32
    %1 = arith.extui %0 : i1 to i32
    %c0_i32_0 = arith.constant 0 : i32
    %2 = arith.cmpi ne, %1, %c0_i32_0 : i32
    scf.if %2 {
      %cst_24 = arith.constant 0.000000e+00 : f32
      %99 = vector.broadcast %cst_24 : f32 to vector<56x128xf32>
      %c0_25 = arith.constant 0 : index
      %c0_26 = arith.constant 0 : index
      %100 = vector.load %arg6[%c0_25, %c0_26] : memref<56x128xf32, #tpu.memory_space<vmem>>, vector<56x128xf32>
      tpu.vector_store %arg6[%c0_25, %c0_26], %99 {strides = array<i32>} : memref<56x128xf32, #tpu.memory_space<vmem>>, vector<56x128xf32>,
    } else {
    }
    %c0 = arith.constant 0 : index
    %c0_1 = arith.constant 0 : index
    %c0_2 = arith.constant 0 : index
    %3 = vector.load %arg3[%c0, %c0_1, %c0_2] : memref<1x8x128xf32, #tpu.memory_space<vmem>>, vector<1x8x128xf32>
    %4 = vector.shape_cast %3 : vector<1x8x128xf32> to vector<8x128xf32>
    %cst = arith.constant 5.000000e-01 : f32
    %5 = vector.broadcast %cst : f32 to vector<8x128xf32>
    %6 = arith.mulf %4, %5 : vector<8x128xf32>
    %7 = arith.fptosi %6 : vector<8x128xf32> to vector<8x128xi32>
    %c0_i32_3 = arith.constant 0 : i32
    %c49_i32 = arith.constant 49 : i32
    %8 = vector.broadcast %c0_i32_3 : i32 to vector<8x128xi32>
    %9 = arith.maxsi %8, %7 : vector<8x128xi32>
    %10 = vector.broadcast %c49_i32 : i32 to vector<8x128xi32>
    %11 = arith.minsi %10, %9 : vector<8x128xi32>
    %12 = arith.trunci %11 : vector<8x128xi32> to vector<8x128xi8>
    %c0_4 = arith.constant 0 : index
    %c0_5 = arith.constant 0 : index
    %c0_6 = arith.constant 0 : index
    %13 = vector.load %arg5[%c0_4, %c0_5, %c0_6] : memref<1x8x128xi8, #tpu.memory_space<vmem>>, vector<1x8x128xi8>
    %14 = vector.shape_cast %13 : vector<1x8x128xi8> to vector<8x128xi8>
    %15 = vector.shape_cast %12 : vector<8x128xi8> to vector<1x8x128xi8>
    tpu.vector_store %arg5[%c0_4, %c0_5, %c0_6], %15 {strides = array<i32>} : memref<1x8x128xi8, #tpu.memory_space<vmem>>, vector<1x8x128xi8>,
    %16 = tpu.iota {dimensions = array<i32: 0>} : vector<56x128xi32>
    %17 = tpu.iota {dimensions = array<i32: 0>} : vector<8x128xi32>
    %c1_i32 = arith.constant 1 : i32
    %18 = arith.muli %arg1, %c1_i32 : i32
    %19 = arith.addi %18, %arg2 : i32
    %c8_i32 = arith.constant 8 : i32
    %20 = arith.muli %19, %c8_i32 : i32
    %cst_7 = arith.constant 0.000000e+00 : f32
    %21 = vector.broadcast %cst_7 : f32 to vector<56x128xf32>
    %c0_i32_8 = arith.constant 0 : i32
    %c8_i32_9 = arith.constant 8 : i32
    %22 = arith.muli %c0_i32_8, %c8_i32_9 : i32
    %23 = tpu.assume_multiple %22, 8 : i32
    %c0_10 = arith.constant 0 : index
    %24 = arith.index_cast %23 : i32 to index
    %c0_11 = arith.constant 0 : index
    %25 = vector.load %arg3[%c0_10, %24, %c0_11] : memref<1x8x128xf32, #tpu.memory_space<vmem>>, vector<1x8x128xf32>
    %26 = vector.shape_cast %25 : vector<1x8x128xf32> to vector<8x128xf32>
    %cst_12 = arith.constant 5.000000e-01 : f32
    %27 = vector.broadcast %cst_12 : f32 to vector<8x128xf32>
    %28 = arith.mulf %26, %27 : vector<8x128xf32>
    %29 = arith.fptosi %28 : vector<8x128xf32> to vector<8x128xi32>
    %c49_i32_13 = arith.constant 49 : i32
    %30 = vector.broadcast %c49_i32_13 : i32 to vector<8x128xi32>
    %31 = arith.minsi %29, %30 : vector<8x128xi32>
    %cst_14 = arith.constant 0.000000e+00 : f32
    %32 = vector.broadcast %cst_14 : f32 to vector<8x128xf32>
    %33 = arith.cmpf oge, %26, %32 : vector<8x128xf32>
    %cst_15 = arith.constant 1.000000e+02 : f32
    %34 = vector.broadcast %cst_15 : f32 to vector<8x128xf32>
    %35 = arith.cmpf ole, %26, %34 : vector<8x128xf32>
    %36 = arith.andi %33, %35 : vector<8x128xi1>
    %37 = arith.addi %20, %23 : i32
    %38 = vector.broadcast %37 : i32 to vector<8x128xi32>
    %39 = arith.addi %38, %17 : vector<8x128xi32>
    %c8_i32_16 = arith.constant 8 : i32
    %40 = vector.broadcast %c8_i32_16 : i32 to vector<8x128xi32>
    %41 = arith.cmpi slt, %39, %40 : vector<8x128xi32>
    %42 = arith.andi %36, %41 : vector<8x128xi1>
    %c-1_i32 = arith.constant -1 : i32
    %43 = vector.broadcast %c-1_i32 : i32 to vector<8x128xi32>
    %44 = arith.select %42, %31, %43 : vector<8x128xi1>, vector<8x128xi32>
    %45 = vector.extract_strided_slice %44 {offsets = [0, 0], sizes = [1, 128], strides = [1, 1]} : vector<8x128xi32> to vector<1x128xi32>
    %46 = vector.broadcast %45 : vector<1x128xi32> to vector<56x128xi32>
    %47 = arith.cmpi eq, %46, %16 : vector<56x128xi32>
    %48 = arith.extui %47 : vector<56x128xi1> to vector<56x128xi32>
    %49 = arith.sitofp %48 : vector<56x128xi32> to vector<56x128xf32>
    %50 = arith.addf %21, %49 : vector<56x128xf32>
    %51 = vector.extract_strided_slice %44 {offsets = [1, 0], sizes = [1, 128], strides = [1, 1]} : vector<8x128xi32> to vector<1x128xi32>
    %52 = vector.broadcast %51 : vector<1x128xi32> to vector<56x128xi32>
    %53 = arith.cmpi eq, %52, %16 : vector<56x128xi32>
    %54 = arith.extui %53 : vector<56x128xi1> to vector<56x128xi32>
    %55 = arith.sitofp %54 : vector<56x128xi32> to vector<56x128xf32>
    %56 = arith.addf %50, %55 : vector<56x128xf32>
    %57 = vector.extract_strided_slice %44 {offsets = [2, 0], sizes = [1, 128], strides = [1, 1]} : vector<8x128xi32> to vector<1x128xi32>
    %58 = vector.broadcast %57 : vector<1x128xi32> to vector<56x128xi32>
    %59 = arith.cmpi eq, %58, %16 : vector<56x128xi32>
    %60 = arith.extui %59 : vector<56x128xi1> to vector<56x128xi32>
    %61 = arith.sitofp %60 : vector<56x128xi32> to vector<56x128xf32>
    %62 = arith.addf %56, %61 : vector<56x128xf32>
    %63 = vector.extract_strided_slice %44 {offsets = [3, 0], sizes = [1, 128], strides = [1, 1]} : vector<8x128xi32> to vector<1x128xi32>
    %64 = vector.broadcast %63 : vector<1x128xi32> to vector<56x128xi32>
    %65 = arith.cmpi eq, %64, %16 : vector<56x128xi32>
    %66 = arith.extui %65 : vector<56x128xi1> to vector<56x128xi32>
    %67 = arith.sitofp %66 : vector<56x128xi32> to vector<56x128xf32>
    %68 = arith.addf %62, %67 : vector<56x128xf32>
    %69 = vector.extract_strided_slice %44 {offsets = [4, 0], sizes = [1, 128], strides = [1, 1]} : vector<8x128xi32> to vector<1x128xi32>
    %70 = vector.broadcast %69 : vector<1x128xi32> to vector<56x128xi32>
    %71 = arith.cmpi eq, %70, %16 : vector<56x128xi32>
    %72 = arith.extui %71 : vector<56x128xi1> to vector<56x128xi32>
    %73 = arith.sitofp %72 : vector<56x128xi32> to vector<56x128xf32>
    %74 = arith.addf %68, %73 : vector<56x128xf32>
    %75 = vector.extract_strided_slice %44 {offsets = [5, 0], sizes = [1, 128], strides = [1, 1]} : vector<8x128xi32> to vector<1x128xi32>
    %76 = vector.broadcast %75 : vector<1x128xi32> to vector<56x128xi32>
    %77 = arith.cmpi eq, %76, %16 : vector<56x128xi32>
    %78 = arith.extui %77 : vector<56x128xi1> to vector<56x128xi32>
    %79 = arith.sitofp %78 : vector<56x128xi32> to vector<56x128xf32>
    %80 = arith.addf %74, %79 : vector<56x128xf32>
    %81 = vector.extract_strided_slice %44 {offsets = [6, 0], sizes = [1, 128], strides = [1, 1]} : vector<8x128xi32> to vector<1x128xi32>
    %82 = vector.broadcast %81 : vector<1x128xi32> to vector<56x128xi32>
    %83 = arith.cmpi eq, %82, %16 : vector<56x128xi32>
    %84 = arith.extui %83 : vector<56x128xi1> to vector<56x128xi32>
    %85 = arith.sitofp %84 : vector<56x128xi32> to vector<56x128xf32>
    %86 = arith.addf %80, %85 : vector<56x128xf32>
    %87 = vector.extract_strided_slice %44 {offsets = [7, 0], sizes = [1, 128], strides = [1, 1]} : vector<8x128xi32> to vector<1x128xi32>
    %88 = vector.broadcast %87 : vector<1x128xi32> to vector<56x128xi32>
    %89 = arith.cmpi eq, %88, %16 : vector<56x128xi32>
    %90 = arith.extui %89 : vector<56x128xi1> to vector<56x128xi32>
    %91 = arith.sitofp %90 : vector<56x128xi32> to vector<56x128xf32>
    %92 = arith.addf %86, %91 : vector<56x128xf32>
    %c1_i32_17 = arith.constant 1 : i32
    %c0_18 = arith.constant 0 : index
    %c0_19 = arith.constant 0 : index
    %93 = vector.load %arg6[%c0_18, %c0_19] : memref<56x128xf32, #tpu.memory_space<vmem>>, vector<56x128xf32>
    %94 = arith.addf %93, %92 : vector<56x128xf32>
    %c0_20 = arith.constant 0 : index
    %c0_21 = arith.constant 0 : index
    %95 = vector.load %arg6[%c0_20, %c0_21] : memref<56x128xf32, #tpu.memory_space<vmem>>, vector<56x128xf32>
    tpu.vector_store %arg6[%c0_20, %c0_21], %94 {strides = array<i32>} : memref<56x128xf32, #tpu.memory_space<vmem>>, vector<56x128xf32>,
    %c0_i32_22 = arith.constant 0 : i32
    %96 = arith.cmpi eq, %arg2, %c0_i32_22 : i32
    %97 = arith.extui %96 : i1 to i32
    %c0_i32_23 = arith.constant 0 : i32
    %98 = arith.cmpi ne, %97, %c0_i32_23 : i32
    scf.if %98 {
      %c0_24 = arith.constant 0 : index
      %c0_25 = arith.constant 0 : index
      %99 = vector.load %arg6[%c0_24, %c0_25] : memref<56x128xf32, #tpu.memory_space<vmem>>, vector<56x128xf32>
      %cst_26 = arith.constant dense<0.000000e+00> : vector<56xf32>
      %100 = vector.multi_reduction <add>, %99, %cst_26 [1] : vector<56x128xf32> to vector<56xf32>
      %101 = vector.shape_cast %100 : vector<56xf32> to vector<56x1xf32>
      %c0_27 = arith.constant 0 : index
      %c0_28 = arith.constant 0 : index
      %c0_29 = arith.constant 0 : index
      %c0_30 = arith.constant 0 : index
      %102 = vector.load %arg4[%c0_27, %c0_28, %c0_29, %c0_30] : memref<1x1x56x1xf32, #tpu.memory_space<vmem>>, vector<1x1x56x1xf32>
      %103 = vector.shape_cast %102 : vector<1x1x56x1xf32> to vector<56x1xf32>
      %104 = vector.shape_cast %101 : vector<56x1xf32> to vector<1x1x56x1xf32>
      tpu.vector_store %arg4[%c0_27, %c0_28, %c0_29, %c0_30], %104 {strides = array<i32>} : memref<1x1x56x1xf32, #tpu.memory_space<vmem>>, vector<1x1x56x1xf32>,
    } else {
    }
    return
  }
  func.func @transform_0(%arg0: i32, %arg1: i32, %arg2: i32) -> (i32, i32, i32) {
    %c0_i32 = arith.constant 0 : i32
    %c0_i32_0 = arith.constant 0 : i32
    return %arg0, %arg2, %c0_i32 : i32, i32, i32
  }
  func.func @transform_1(%arg0: i32, %arg1: i32, %arg2: i32) -> (i32, i32, i32, i32) {
    %c0_i32 = arith.constant 0 : i32
    %c0_i32_0 = arith.constant 0 : i32
    %c0_i32_1 = arith.constant 0 : i32
    return %arg0, %arg1, %c0_i32, %c0_i32_0 : i32, i32, i32, i32
  }
  func.func @transform_2(%arg0: i32, %arg1: i32, %arg2: i32) -> (i32, i32, i32) {
    %c0_i32 = arith.constant 0 : i32
    %c0_i32_0 = arith.constant 0 : i32
    return %arg0, %arg2, %c0_i32 : i32, i32, i32
  }
}

</mosaic_0001>

<llo_original>
// kernel: tpu_custom_call.1
$region0: #{tpu_custom_call.1}
  #allocation0 [shape = 'u32[]', space=smem, size = 0x4, offset = 0x4, fixed_abs, tag = 'smem constant byte address 0x4 - core index']
  #allocation1 [shape = 'u32[144,128]{1,0:T(1,128)}', space=vmem, size = 0x12000, scoped, tag = 'internal scratch']
  #allocation2 [shape = 'f32[56,128]{1,0:T(8,128)}', space=vmem, size = 0x7000, scoped, tag = 'scratch operand']
  %s0 = inlined_call_operand.hbm [shape: f32[2,8,128], index: 0, kind: input, shape index: {}]
  %s1 = inlined_call_operand.vmem [shape: f32[2,1,56,1], index: 1, kind: output, shape index: {0}]
  %s2 = inlined_call_operand.hbm [shape: s8[2,8,128], index: 2, kind: output, shape index: {1}]
  %3 = xla_tuple %s1, %s2
  %s4 = sld [smem:[#allocation0]]
  $region57: #{tpu_custom_call.1} parent=0
    _
  %s6 = ssub.s32 1, %s4
  %s7 = scalar_select 0, %s6, %s4
  $region1: #{tpu_custom_call.1} parent=0
    #allocation3 [shape = 'u8[8192]{0}', space=vmem, size = 0x2000, scoped, tag = 'input window, operand 0']
    #allocation4 [shape = 's32[2]{0}', space=sflag, size = 0x8, scoped, tag = 'scoped memory for tpu_custom_call.1']
    #allocation5 [shape = 's32[2]{0}', space=sflag, size = 0x8, scoped, tag = 'scoped memory for tpu_custom_call.1']
    #allocation6 [shape = 'u8[2048]{0}', space=vmem, size = 0x800, scoped, tag = 'output window, operand 1']
    %8 = vsyncpa [#allocation4], 0
    %s9 = scalar_lea.sflag [#allocation4], 1
    %10 = vsyncpa %s9, 0
    %11 = vsyncpa [#allocation5], 0
    %s12 = scalar_lea.sflag [#allocation5], 1
    %13 = vsyncpa %s12, 0
    loop: start=0, step=1, limit=4
    $region2: #{tpu_custom_call.1} parent=1 // loop_pre_header
      _
    $region3: #{tpu_custom_call.1} parent=1 // loop_header
      %s15 = sphi 0, %s19
      %p16 = scmp.ge.s32.totalorder %s15, 4
      %s22 = sphi 0, %s41
      %s23 = sphi 0, %s37
      %s24 = sphi 0, %s33
      %s25 = sphi 0, %s22
      %s26 = sphi 0, %s23
      %s27 = sphi 0, %s24
      %s28 = sphi 0, %s25
      %s29 = sphi 0, %s26
      %s30 = sphi 0, %s27
      %s46 = sphi 0, %s48
      %s49 = sphi 0, %s46
      %s50 = sphi 0, %s49
      %s66 = sphi 0, %s50
      %s74 = sphi 0, %s76
      %s77 = sphi 0, %s74
      %s78 = sphi 0, %s77
      %s94 = sphi 0, %s78
      %s102 = sphi 0, %s104
      %s105 = sphi 0, %s102
      %s106 = sphi 0, %s105
      %s122 = sphi 0, %s106
    $region4: #{tpu_custom_call.1} parent=1 // loop_header_branch
      %18 = sbr.rel (%p16) target = $region8
    $region5: #{tpu_custom_call.1} parent=1 // loop_body
      %s20 = ssub.s32 %s15, 1
      %s21 = ssub.s32 %s15, 2
      %s31 = sadd.s32 1, %s24
      %p32 = scmp.ge.s32.totalorder %s31, 1
      %s33 = scalar_select %p32, 0, %s31
      %s34 = sadd.s32 1, %s23
      %s35 = scalar_select %p32, %s34, %s23
      %p36 = scmp.ge.s32.totalorder %s35, 1
      %s37 = scalar_select %p36, 0, %s35
      %s38 = sadd.s32 1, %s22
      %s39 = scalar_select %p36, %s38, %s22
      %p40 = scmp.ge.s32.totalorder %s39, 2
      %s41 = scalar_select %p40, 0, %s39
      %s42 = ssub.s32 %s22, %s41
      %s43 = ssub.s32 %s24, %s33
      %s44 = sor.u32 %s42, %s43
      %p45 = scmp.eq.s32.totalorder %s44, 0
      %s47 = sadd.s32 %s46, 1
      %s48 = scalar_select %p45, %s46, %s47
      %p51 = pneg %p45
      %p52 = scmp.eq.s32.totalorder %s15, 1
      %p53 = por %p51, %p52
      %p54 = scmp.ne.s32.totalorder %s46, %s49
      %p55 = scmp.eq.s32.totalorder %s15, 0
      %p56 = por %p54, %p55
      %p57 = scmp.ne.s32.totalorder %s46, %s49
      %p58 = scmp.eq.s32.totalorder %s20, 1
      %p59 = por %p57, %p58
      %p60 = scmp.ne.s32.totalorder %s49, %s50
      %p61 = scmp.eq.s32.totalorder %s20, 0
      %p62 = por %p60, %p61
      %p63 = scmp.ne.s32.totalorder %s49, %s50
      %p64 = scmp.eq.s32.totalorder %s21, 1
      %p65 = por %p63, %p64
      %p67 = scmp.ne.s32.totalorder %s50, %s66
      %p68 = scmp.eq.s32.totalorder %s21, 0
      %p69 = por %p67, %p68
      %s70 = ssub.s32 %s22, %s41
      %s71 = ssub.s32 %s23, %s37
      %s72 = sor.u32 %s70, %s71
      %p73 = scmp.eq.s32.totalorder %s72, 0
      %s75 = sadd.s32 %s74, 1
      %s76 = scalar_select %p73, %s74, %s75
      %p79 = pneg %p73
      %p80 = scmp.eq.s32.totalorder %s15, 1
      %p81 = por %p79, %p80
      %p82 = scmp.ne.s32.totalorder %s74, %s77
      %p83 = scmp.eq.s32.totalorder %s15, 0
      %p84 = por %p82, %p83
      %p85 = scmp.ne.s32.totalorder %s74, %s77
      %p86 = scmp.eq.s32.totalorder %s20, 1
      %p87 = por %p85, %p86
      %p88 = scmp.ne.s32.totalorder %s77, %s78
      %p89 = scmp.eq.s32.totalorder %s20, 0
      %p90 = por %p88, %p89
      %p91 = scmp.ne.s32.totalorder %s77, %s78
      %p92 = scmp.eq.s32.totalorder %s21, 1
      %p93 = por %p91, %p92
      %p95 = scmp.ne.s32.totalorder %s78, %s94
      %p96 = scmp.eq.s32.totalorder %s21, 0
      %p97 = por %p95, %p96
      %s98 = ssub.s32 %s22, %s41
      %s99 = ssub.s32 %s24, %s33
      %s100 = sor.u32 %s98, %s99
      %p101 = scmp.eq.s32.totalorder %s100, 0
      %s103 = sadd.s32 %s102, 1
      %s104 = scalar_select %p101, %s102, %s103
      %p107 = pneg %p101
      %p108 = scmp.eq.s32.totalorder %s15, 1
      %p109 = por %p107, %p108
      %p110 = scmp.ne.s32.totalorder %s102, %s105
      %p111 = scmp.eq.s32.totalorder %s15, 0
      %p112 = por %p110, %p111
      %p113 = scmp.ne.s32.totalorder %s102, %s105
      %p114 = scmp.eq.s32.totalorder %s20, 1
      %p115 = por %p113, %p114
      %p116 = scmp.ne.s32.totalorder %s105, %s106
      %p117 = scmp.eq.s32.totalorder %s20, 0
      %p118 = por %p116, %p117
      %p119 = scmp.ne.s32.totalorder %s105, %s106
      %p120 = scmp.eq.s32.totalorder %s21, 1
      %p121 = por %p119, %p120
      %p123 = scmp.ne.s32.totalorder %s106, %s122
      %p124 = scmp.eq.s32.totalorder %s21, 0
      %p125 = por %p123, %p124
      %p126 = scmp.le.s32.totalorder 1, %s15
      %p127 = scmp.lt.s32.totalorder %s15, 3
      %p128 = pnand %p126, %p127
      %p129 = pneg %p128
      // Predicated region
      $region9: #{tpu_custom_call.1} parent=5 // pred_check
        _
      $region10: #{tpu_custom_call.1} parent=5 // pred_check_branch
        %131 = sbr.rel (%p128) target = $region12
      $region11: #{tpu_custom_call.1} parent=5 // pred_region
        %s132 = ssub.s32 %s15, 1
      $region12: #{tpu_custom_call.1} parent=5 // pred_fallthru
        _
      %p133 = scmp.lt.s32.totalorder %s15, 2
      // Predicated region
      $region13: #{tpu_custom_call.1} parent=5 // pred_check
        %p134 = pneg %p133
      $region14: #{tpu_custom_call.1} parent=5 // pred_check_branch
        %136 = sbr.rel (%p134) target = $region16
      $region15: #{tpu_custom_call.1} parent=5 // pred_region
        // Predicated region
        $region17: #{tpu_custom_call.1} parent=15 // pred_check
          %p137 = pneg %p56
        $region18: #{tpu_custom_call.1} parent=15 // pred_check_branch
          %139 = sbr.rel (%p137) target = $region20
        $region19: #{tpu_custom_call.1} parent=15 // pred_region
          %s140 = sand.u32 %s46, 1
          %s141 = scalar_lea.sflag [#allocation4], %s140
          %s142 = sand.u32 %s46, 1
          %s143 = smul.addr %s142, 8
          %s144 = scalar_lea.vmem [#allocation3], %s143
          %s146 = ssub.s32 128, 128
          %147 = vsyncadd %s141, %s146
          %s148 = sadd.s32 %s24, %s22
          %s149 = smul.addr %s148, 128
          %s150 = scalar_lea.hbm %s0, %s149
          %s152 = sshll.u32 %s144, 4
          %s153 = int_to_ptr.vmem [resolvable:$true] %s152
          %155 = dma.hbm_to_vmem [thread:$0]  %s150, 128, %s153, %s141
        $region20: #{tpu_custom_call.1} parent=15 // pred_fallthru
          _
      $region16: #{tpu_custom_call.1} parent=5 // pred_fallthru
        _
      %p156 = scmp.le.s32.totalorder 1, %s15
      %p157 = scmp.lt.s32.totalorder %s15, 3
      %p158 = pnand %p156, %p157
      %p159 = pneg %p158
      // Predicated region
      $region21: #{tpu_custom_call.1} parent=5 // pred_check
        _
      $region22: #{tpu_custom_call.1} parent=5 // pred_check_branch
        %161 = sbr.rel (%p158) target = $region24
      $region23: #{tpu_custom_call.1} parent=5 // pred_region
        %s162 = ssub.s32 %s15, 1
        %s163 = sand.u32 %s49, 1
        %s164 = scalar_lea.sflag [#allocation4], %s163
        %s165 = sand.u32 %s49, 1
        %s166 = smul.addr %s165, 8
        %s167 = scalar_lea.vmem [#allocation3], %s166
        // Predicated region
        $region25: #{tpu_custom_call.1} parent=23 // pred_check
          %p168 = pneg %p62
        $region26: #{tpu_custom_call.1} parent=23 // pred_check_branch
          %170 = sbr.rel (%p168) target = $region28
        $region27: #{tpu_custom_call.1} parent=23 // pred_region
          %171 = dma.done %s164, 128
        $region28: #{tpu_custom_call.1} parent=23 // pred_fallthru
          _
        %s172 = sand.u32 %s49, 1
        %s173 = scalar_lea.sflag [#allocation4], %s172
        %s174 = sand.u32 %s49, 1
        %s175 = smul.addr %s174, 8
        %s176 = scalar_lea.vmem [#allocation3], %s175
        %p177 = pneg %p62
        %p178 = pneg %p59
        %p179 = pneg %p90
        %p180 = pneg %p87
        %p181 = scmp.lt.s32.totalorder %s25, 1
        %s182 = scalar_select %p181, %s25, 1
        %p183 = scmp.lt.s32.totalorder %s26, 0
        %s184 = scalar_select %p183, %s26, 0
        %s185 = smul.addr %s184, 7
        %s186 = smul.addr %s182, 7
        %s187 = sadd.s32 %s185, %s186
        %s188 = smul.addr %s187, 8
        %s189 = scalar_lea.vmem %s1, %s188
        %p190 = pneg %p118
        %p191 = pneg %p115
        %s192 = sand.u32 %s105, 1
        %s193 = scalar_lea.sflag [#allocation5], %s192
        %s194 = sand.u32 %s105, 1
        %s195 = smul.addr %s194, 2
        %s196 = scalar_lea.vmem [#allocation6], %s195
        %p197 = scmp.lt.s32.totalorder %s25, 1
        %s198 = scalar_select %p197, %s25, 1
        %p199 = scmp.lt.s32.totalorder %s26, 0
        %s200 = scalar_select %p199, %s26, 0
        %s201 = smul.addr %s200, 7
        %s202 = smul.addr %s198, 7
        %s203 = sadd.s32 %s201, %s202
        %s204 = smul.addr %s203, 8
        %s205 = scalar_lea.vmem %s1, %s204
        %p206 = scmp.eq.s32.totalorder %s27, 0
        // Predicated region
        $region29: #{tpu_custom_call.1} parent=23 // pred_check
          %p207 = pneg %p206
        $region30: #{tpu_custom_call.1} parent=23 // pred_check_branch
          %209 = sbr.rel (%p207) target = $region32
        $region31: #{tpu_custom_call.1} parent=23 // pred_region
          %210 = vst [vmem:[#allocation2] sm:$0xff] 0.0
          %211 = vst [vmem:[#allocation2 + $0x8] sm:$0xff] 0.0
          %212 = vst [vmem:[#allocation2 + $0x10] sm:$0xff] 0.0
          %213 = vst [vmem:[#allocation2 + $0x18] sm:$0xff] 0.0
          %214 = vst [vmem:[#allocation2 + $0x20] sm:$0xff] 0.0
          %215 = vst [vmem:[#allocation2 + $0x28] sm:$0xff] 0.0
          %216 = vst [vmem:[#allocation2 + $0x30] sm:$0xff] 0.0
        $region32: #{tpu_custom_call.1} parent=23 // pred_fallthru
          _
        %v217 = vld [vmem:[%s167] sm:$0xff]
        %v218 = vmul.f32 %v217, 0.5
        %v219 = vcvt.f32.s32.to.zero.pseudo %v218
        %vm220 = vcmp.gt.s32.totalorder %v219, 0
        %v221 = vsel %vm220, %v219, 0
        %vm222 = vcmp.lt.s32.totalorder %v221, 49
        %v223 = vsel %vm222, %v221, 49
        %v224 = vpack.c.b16 %v223, %v223
        %v225 = vpack.c.b8 %v224, %v224
        %226 = vst [vmem:[%s196] sm:$0x3] %v225
        %v227 = vlaneseq
        %v228 = vshrl.u32 %v227, 7
        %v229 = vadd.s32 %v228, 8
        %v230 = vadd.s32 %v228, 16
        %v231 = vadd.s32 %v228, 24
        %v232 = vadd.s32 %v228, 32
        %v233 = vadd.s32 %v228, 40
        %v234 = vadd.s32 %v228, 48
        %s235 = sadd.s32 %s26, %s27
        %s236 = smul.u32 %s235, 8
        %v237 = vld [vmem:[%s167] sm:$0xff]
        %v238 = vmul.f32 %v237, 0.5
        %v239 = vcvt.f32.s32.to.zero.pseudo %v238
        %vm240 = vcmp.lt.s32.totalorder %v239, 49
        %v241 = vsel %vm240, %v239, 49
        %vm242 = vcmp.ge.f32.partialorder %v237, 0.0
        %vm243 = vcmp.le.f32.partialorder %v237, 100.0
        %vm244 = vmand %vm242, %vm243
        %s245 = sadd.s32 %s236, 0
        %v246 = vstv %s245
        %v247 = vadd.s32 %v246, %v228
        %vm248 = vcmp.lt.s32.totalorder %v247, 8
        %vm249 = vmand %vm244, %vm248
        %v250 = vsel %vm249, %v241, 4294967295
        %v251 = vlaneseq
        %v252 = vshrl.u32 %v251, 7
        %v253 = vsub.s32 0, %v252
        %v254 = vrot.slane %v250, %v253
        %vm255 = vcmp.eq.s32.totalorder %v254, %v228
        %vm256 = vcmp.eq.s32.totalorder %v254, %v229
        %vm257 = vcmp.eq.s32.totalorder %v254, %v230
        %vm258 = vcmp.eq.s32.totalorder %v254, %v231
        %vm259 = vcmp.eq.s32.totalorder %v254, %v232
        %vm260 = vcmp.eq.s32.totalorder %v254, %v233
        %vm261 = vcmp.eq.s32.totalorder %v254, %v234
        %v262 = vsel %vm255, 1, 0
        %v263 = vsel %vm256, 1, 0
        %v264 = vsel %vm257, 1, 0
        %v265 = vsel %vm258, 1, 0
        %v266 = vsel %vm259, 1, 0
        %v267 = vsel %vm260, 1, 0
        %v268 = vsel %vm261, 1, 0
        %v269 = vcvt.s32.f32 %v262
        %v270 = vcvt.s32.f32 %v263
        %v271 = vcvt.s32.f32 %v264
        %v272 = vcvt.s32.f32 %v265
        %v273 = vcvt.s32.f32 %v266
        %v274 = vcvt.s32.f32 %v267
        %v275 = vcvt.s32.f32 %v268
        %v276 = vadd.f32 %v269, 0.0
        %v277 = vadd.f32 %v270, 0.0
        %v278 = vadd.f32 %v271, 0.0
        %v279 = vadd.f32 %v272, 0.0
        %v280 = vadd.f32 %v273, 0.0
        %v281 = vadd.f32 %v274, 0.0
        %v282 = vadd.f32 %v275, 0.0
        %v283 = vlaneseq
        %v284 = vshrl.u32 %v283, 7
        %v285 = vsub.s32 1, %v284
        %v286 = vrot.slane %v250, %v285
        %vm287 = vcmp.eq.s32.totalorder %v286, %v228
        %vm288 = vcmp.eq.s32.totalorder %v286, %v229
        %vm289 = vcmp.eq.s32.totalorder %v286, %v230
        %vm290 = vcmp.eq.s32.totalorder %v286, %v231
        %vm291 = vcmp.eq.s32.totalorder %v286, %v232
        %vm292 = vcmp.eq.s32.totalorder %v286, %v233
        %vm293 = vcmp.eq.s32.totalorder %v286, %v234
        %v294 = vsel %vm287, 1, 0
        %v295 = vsel %vm288, 1, 0
        %v296 = vsel %vm289, 1, 0
        %v297 = vsel %vm290, 1, 0
        %v298 = vsel %vm291, 1, 0
        %v299 = vsel %vm292, 1, 0
        %v300 = vsel %vm293, 1, 0
        %v301 = vcvt.s32.f32 %v294
        %v302 = vcvt.s32.f32 %v295
        %v303 = vcvt.s32.f32 %v296
        %v304 = vcvt.s32.f32 %v297
        %v305 = vcvt.s32.f32 %v298
        %v306 = vcvt.s32.f32 %v299
        %v307 = vcvt.s32.f32 %v300
        %v308 = vadd.f32 %v276, %v301
        %v309 = vadd.f32 %v277, %v302
        %v310 = vadd.f32 %v278, %v303
        %v311 = vadd.f32 %v279, %v304
        %v312 = vadd.f32 %v280, %v305
        %v313 = vadd.f32 %v281, %v306
        %v314 = vadd.f32 %v282, %v307
        %v315 = vlaneseq
        %v316 = vshrl.u32 %v315, 7
        %v317 = vsub.s32 2, %v316
        %v318 = vrot.slane %v250, %v317
        %vm319 = vcmp.eq.s32.totalorder %v318, %v228
        %vm320 = vcmp.eq.s32.totalorder %v318, %v229
        %vm321 = vcmp.eq.s32.totalorder %v318, %v230
        %vm322 = vcmp.eq.s32.totalorder %v318, %v231
        %vm323 = vcmp.eq.s32.totalorder %v318, %v232
        %vm324 = vcmp.eq.s32.totalorder %v318, %v233
        %vm325 = vcmp.eq.s32.totalorder %v318, %v234
        %v326 = vsel %vm319, 1, 0
        %v327 = vsel %vm320, 1, 0
        %v328 = vsel %vm321, 1, 0
        %v329 = vsel %vm322, 1, 0
        %v330 = vsel %vm323, 1, 0
        %v331 = vsel %vm324, 1, 0
        %v332 = vsel %vm325, 1, 0
        %v333 = vcvt.s32.f32 %v326
        %v334 = vcvt.s32.f32 %v327
        %v335 = vcvt.s32.f32 %v328
        %v336 = vcvt.s32.f32 %v329
        %v337 = vcvt.s32.f32 %v330
        %v338 = vcvt.s32.f32 %v331
        %v339 = vcvt.s32.f32 %v332
        %v340 = vadd.f32 %v308, %v333
        %v341 = vadd.f32 %v309, %v334
        %v342 = vadd.f32 %v310, %v335
        %v343 = vadd.f32 %v311, %v336
        %v344 = vadd.f32 %v312, %v337
        %v345 = vadd.f32 %v313, %v338
        %v346 = vadd.f32 %v314, %v339
        %v347 = vlaneseq
        %v348 = vshrl.u32 %v347, 7
        %v349 = vsub.s32 3, %v348
        %v350 = vrot.slane %v250, %v349
        %vm351 = vcmp.eq.s32.totalorder %v350, %v228
        %vm352 = vcmp.eq.s32.totalorder %v350, %v229
        %vm353 = vcmp.eq.s32.totalorder %v350, %v230
        %vm354 = vcmp.eq.s32.totalorder %v350, %v231
        %vm355 = vcmp.eq.s32.totalorder %v350, %v232
        %vm356 = vcmp.eq.s32.totalorder %v350, %v233
        %vm357 = vcmp.eq.s32.totalorder %v350, %v234
        %v358 = vsel %vm351, 1, 0
        %v359 = vsel %vm352, 1, 0
        %v360 = vsel %vm353, 1, 0
        %v361 = vsel %vm354, 1, 0
        %v362 = vsel %vm355, 1, 0
        %v363 = vsel %vm356, 1, 0
        %v364 = vsel %vm357, 1, 0
        %v365 = vcvt.s32.f32 %v358
        %v366 = vcvt.s32.f32 %v359
        %v367 = vcvt.s32.f32 %v360
        %v368 = vcvt.s32.f32 %v361
        %v369 = vcvt.s32.f32 %v362
        %v370 = vcvt.s32.f32 %v363
        %v371 = vcvt.s32.f32 %v364
        %v372 = vadd.f32 %v340, %v365
        %v373 = vadd.f32 %v341, %v366
        %v374 = vadd.f32 %v342, %v367
        %v375 = vadd.f32 %v343, %v368
        %v376 = vadd.f32 %v344, %v369
        %v377 = vadd.f32 %v345, %v370
        %v378 = vadd.f32 %v346, %v371
        %v379 = vlaneseq
        %v380 = vshrl.u32 %v379, 7
        %v381 = vsub.s32 4, %v380
        %v382 = vrot.slane %v250, %v381
        %vm383 = vcmp.eq.s32.totalorder %v382, %v228
        %vm384 = vcmp.eq.s32.totalorder %v382, %v229
        %vm385 = vcmp.eq.s32.totalorder %v382, %v230
        %vm386 = vcmp.eq.s32.totalorder %v382, %v231
        %vm387 = vcmp.eq.s32.totalorder %v382, %v232
        %vm388 = vcmp.eq.s32.totalorder %v382, %v233
        %vm389 = vcmp.eq.s32.totalorder %v382, %v234
        %v390 = vsel %vm383, 1, 0
        %v391 = vsel %vm384, 1, 0
        %v392 = vsel %vm385, 1, 0
        %v393 = vsel %vm386, 1, 0
        %v394 = vsel %vm387, 1, 0
        %v395 = vsel %vm388, 1, 0
        %v396 = vsel %vm389, 1, 0
        %v397 = vcvt.s32.f32 %v390
        %v398 = vcvt.s32.f32 %v391
        %v399 = vcvt.s32.f32 %v392
        %v400 = vcvt.s32.f32 %v393
        %v401 = vcvt.s32.f32 %v394
        %v402 = vcvt.s32.f32 %v395
        %v403 = vcvt.s32.f32 %v396
        %v404 = vadd.f32 %v372, %v397
        %v405 = vadd.f32 %v373, %v398
        %v406 = vadd.f32 %v374, %v399
        %v407 = vadd.f32 %v375, %v400
        %v408 = vadd.f32 %v376, %v401
        %v409 = vadd.f32 %v377, %v402
        %v410 = vadd.f32 %v378, %v403
        %v411 = vlaneseq
        %v412 = vshrl.u32 %v411, 7
        %v413 = vsub.s32 5, %v412
        %v414 = vrot.slane %v250, %v413
        %vm415 = vcmp.eq.s32.totalorder %v414, %v228
        %vm416 = vcmp.eq.s32.totalorder %v414, %v229
        %vm417 = vcmp.eq.s32.totalorder %v414, %v230
        %vm418 = vcmp.eq.s32.totalorder %v414, %v231
        %vm419 = vcmp.eq.s32.totalorder %v414, %v232
        %vm420 = vcmp.eq.s32.totalorder %v414, %v233
        %vm421 = vcmp.eq.s32.totalorder %v414, %v234
        %v422 = vsel %vm415, 1, 0
        %v423 = vsel %vm416, 1, 0
        %v424 = vsel %vm417, 1, 0
        %v425 = vsel %vm418, 1, 0
        %v426 = vsel %vm419, 1, 0
        %v427 = vsel %vm420, 1, 0
        %v428 = vsel %vm421, 1, 0
        %v429 = vcvt.s32.f32 %v422
        %v430 = vcvt.s32.f32 %v423
        %v431 = vcvt.s32.f32 %v424
        %v432 = vcvt.s32.f32 %v425
        %v433 = vcvt.s32.f32 %v426
        %v434 = vcvt.s32.f32 %v427
        %v435 = vcvt.s32.f32 %v428
        %v436 = vadd.f32 %v404, %v429
        %v437 = vadd.f32 %v405, %v430
        %v438 = vadd.f32 %v406, %v431
        %v439 = vadd.f32 %v407, %v432
        %v440 = vadd.f32 %v408, %v433
        %v441 = vadd.f32 %v409, %v434
        %v442 = vadd.f32 %v410, %v435
        %v443 = vlaneseq
        %v444 = vshrl.u32 %v443, 7
        %v445 = vsub.s32 6, %v444
        %v446 = vrot.slane %v250, %v445
        %vm447 = vcmp.eq.s32.totalorder %v446, %v228
        %vm448 = vcmp.eq.s32.totalorder %v446, %v229
        %vm449 = vcmp.eq.s32.totalorder %v446, %v230
        %vm450 = vcmp.eq.s32.totalorder %v446, %v231
        %vm451 = vcmp.eq.s32.totalorder %v446, %v232
        %vm452 = vcmp.eq.s32.totalorder %v446, %v233
        %vm453 = vcmp.eq.s32.totalorder %v446, %v234
        %v454 = vsel %vm447, 1, 0
        %v455 = vsel %vm448, 1, 0
        %v456 = vsel %vm449, 1, 0
        %v457 = vsel %vm450, 1, 0
        %v458 = vsel %vm451, 1, 0
        %v459 = vsel %vm452, 1, 0
        %v460 = vsel %vm453, 1, 0
        %v461 = vcvt.s32.f32 %v454
        %v462 = vcvt.s32.f32 %v455
        %v463 = vcvt.s32.f32 %v456
        %v464 = vcvt.s32.f32 %v457
        %v465 = vcvt.s32.f32 %v458
        %v466 = vcvt.s32.f32 %v459
        %v467 = vcvt.s32.f32 %v460
        %v468 = vadd.f32 %v436, %v461
        %v469 = vadd.f32 %v437, %v462
        %v470 = vadd.f32 %v438, %v463
        %v471 = vadd.f32 %v439, %v464
        %v472 = vadd.f32 %v440, %v465
        %v473 = vadd.f32 %v441, %v466
        %v474 = vadd.f32 %v442, %v467
        %v475 = vlaneseq
        %v476 = vshrl.u32 %v475, 7
        %v477 = vsub.s32 7, %v476
        %v478 = vrot.slane %v250, %v477
        %vm479 = vcmp.eq.s32.totalorder %v478, %v228
        %vm480 = vcmp.eq.s32.totalorder %v478, %v229
        %vm481 = vcmp.eq.s32.totalorder %v478, %v230
        %vm482 = vcmp.eq.s32.totalorder %v478, %v231
        %vm483 = vcmp.eq.s32.totalorder %v478, %v232
        %vm484 = vcmp.eq.s32.totalorder %v478, %v233
        %vm485 = vcmp.eq.s32.totalorder %v478, %v234
        %v486 = vsel %vm479, 1, 0
        %v487 = vsel %vm480, 1, 0
        %v488 = vsel %vm481, 1, 0
        %v489 = vsel %vm482, 1, 0
        %v490 = vsel %vm483, 1, 0
        %v491 = vsel %vm484, 1, 0
        %v492 = vsel %vm485, 1, 0
        %v493 = vcvt.s32.f32 %v486
        %v494 = vcvt.s32.f32 %v487
        %v495 = vcvt.s32.f32 %v488
        %v496 = vcvt.s32.f32 %v489
        %v497 = vcvt.s32.f32 %v490
        %v498 = vcvt.s32.f32 %v491
        %v499 = vcvt.s32.f32 %v492
        %v500 = vadd.f32 %v468, %v493
        %v501 = vadd.f32 %v469, %v494
        %v502 = vadd.f32 %v470, %v495
        %v503 = vadd.f32 %v471, %v496
        %v504 = vadd.f32 %v472, %v497
        %v505 = vadd.f32 %v473, %v498
        %v506 = vadd.f32 %v474, %v499
        %v507 = vld [vmem:[#allocation2] sm:$0xff]
        %v508 = vld [vmem:[#allocation2 + $0x8] sm:$0xff]
        %v509 = vld [vmem:[#allocation2 + $0x10] sm:$0xff]
        %v510 = vld [vmem:[#allocation2 + $0x18] sm:$0xff]
        %v511 = vld [vmem:[#allocation2 + $0x20] sm:$0xff]
        %v512 = vld [vmem:[#allocation2 + $0x28] sm:$0xff]
        %v513 = vld [vmem:[#allocation2 + $0x30] sm:$0xff]
        %v514 = vadd.f32 %v507, %v500
        %v515 = vadd.f32 %v508, %v501
        %v516 = vadd.f32 %v509, %v502
        %v517 = vadd.f32 %v510, %v503
        %v518 = vadd.f32 %v511, %v504
        %v519 = vadd.f32 %v512, %v505
        %v520 = vadd.f32 %v513, %v506
        %521 = vst [vmem:[#allocation2] sm:$0xff] %v514
        %522 = vst [vmem:[#allocation2 + $0x8] sm:$0xff] %v515
        %523 = vst [vmem:[#allocation2 + $0x10] sm:$0xff] %v516
        %524 = vst [vmem:[#allocation2 + $0x18] sm:$0xff] %v517
        %525 = vst [vmem:[#allocation2 + $0x20] sm:$0xff] %v518
        %526 = vst [vmem:[#allocation2 + $0x28] sm:$0xff] %v519
        %527 = vst [vmem:[#allocation2 + $0x30] sm:$0xff] %v520
        // Predicated region
        $region33: #{tpu_custom_call.1} parent=23 // pred_check
          %p528 = pneg %p206
        $region34: #{tpu_custom_call.1} parent=23 // pred_check_branch
          %530 = sbr.rel (%p528) target = $region36
        $region35: #{tpu_custom_call.1} parent=23 // pred_region
          %v531 = vld [vmem:[#allocation2] sm:$0xff]
          %v532 = vld [vmem:[#allocation2 + $0x8] sm:$0xff]
          %v533 = vld [vmem:[#allocation2 + $0x10] sm:$0xff]
          %v534 = vld [vmem:[#allocation2 + $0x18] sm:$0xff]
          %v535 = vld [vmem:[#allocation2 + $0x20] sm:$0xff]
          %v536 = vld [vmem:[#allocation2 + $0x28] sm:$0xff]
          %v537 = vld [vmem:[#allocation2 + $0x30] sm:$0xff]
          %538 = vadd.xlane.f32.xlu0 %v531
          %v539 = vpop.xlane.xlu0 %538
          %540 = vadd.xlane.f32.xlu0 %v532
          %v541 = vpop.xlane.xlu0 %540
          %542 = vadd.xlane.f32.xlu0 %v533
          %v543 = vpop.xlane.xlu0 %542
          %544 = vadd.xlane.f32.xlu0 %v534
          %v545 = vpop.xlane.xlu0 %544
          %546 = vadd.xlane.f32.xlu0 %v535
          %v547 = vpop.xlane.xlu0 %546
          %548 = vadd.xlane.f32.xlu0 %v536
          %v549 = vpop.xlane.xlu0 %548
          %550 = vadd.xlane.f32.xlu0 %v537
          %v551 = vpop.xlane.xlu0 %550
          %vm552 = vcmask 7168
          %553 = vst.msk [vmem:[%s205] sm:$0xff] %vm552, %v539
          %554 = vst.msk [vmem:[%s205 + $0x8] sm:$0xff] %vm552, %v541
          %555 = vst.msk [vmem:[%s205 + $0x10] sm:$0xff] %vm552, %v543
          %556 = vst.msk [vmem:[%s205 + $0x18] sm:$0xff] %vm552, %v545
          %557 = vst.msk [vmem:[%s205 + $0x20] sm:$0xff] %vm552, %v547
          %558 = vst.msk [vmem:[%s205 + $0x28] sm:$0xff] %vm552, %v549
          %559 = vst.msk [vmem:[%s205 + $0x30] sm:$0xff] %vm552, %v551
        $region36: #{tpu_custom_call.1} parent=23 // pred_fallthru
          _
        %p560 = scmp.lt.s32.totalorder %s25, 1
        %s561 = scalar_select %p560, %s25, 1
        %p562 = scmp.lt.s32.totalorder %s26, 0
        %s563 = scalar_select %p562, %s26, 0
        %s564 = smul.addr %s563, 7
        %s565 = smul.addr %s561, 7
        %s566 = sadd.s32 %s564, %s565
        %s567 = smul.addr %s566, 8
        %s568 = scalar_lea.vmem %s1, %s567
        %s569 = sand.u32 %s105, 1
        %s570 = scalar_lea.sflag [#allocation5], %s569
        %s571 = sand.u32 %s105, 1
        %s572 = smul.addr %s571, 2
        %s573 = scalar_lea.vmem [#allocation6], %s572
        // Predicated region
        $region37: #{tpu_custom_call.1} parent=23 // pred_check
          %p574 = pneg %p87
        $region38: #{tpu_custom_call.1} parent=23 // pred_check_branch
          %576 = sbr.rel (%p574) target = $region40
        $region39: #{tpu_custom_call.1} parent=23 // pred_region
          _
        $region40: #{tpu_custom_call.1} parent=23 // pred_fallthru
          _
        // Predicated region
        $region41: #{tpu_custom_call.1} parent=23 // pred_check
          %p577 = pneg %p115
        $region42: #{tpu_custom_call.1} parent=23 // pred_check_branch
          %579 = sbr.rel (%p577) target = $region44
        $region43: #{tpu_custom_call.1} parent=23 // pred_region
          %s581 = ssub.s32 32, 32
          %582 = vsyncadd %s570, %s581
          %s583 = sadd.s32 %s27, %s25
          %s584 = smul.addr %s583, 32
          %s585 = scalar_lea.hbm %s2, %s584
          %s587 = sshll.u32 %s573, 4
          %s588 = int_to_ptr.vmem [resolvable:$true] %s587
          %590 = dma.vmem_to_hbm [thread:$0]  %s588, 32, %s585, %s570
        $region44: #{tpu_custom_call.1} parent=23 // pred_fallthru
          _
      $region24: #{tpu_custom_call.1} parent=5 // pred_fallthru
        _
      %p591 = scmp.le.s32.totalorder 2, %s15
      // Predicated region
      $region45: #{tpu_custom_call.1} parent=5 // pred_check
        %p592 = pneg %p591
      $region46: #{tpu_custom_call.1} parent=5 // pred_check_branch
        %594 = sbr.rel (%p592) target = $region48
      $region47: #{tpu_custom_call.1} parent=5 // pred_region
        %s595 = ssub.s32 %s15, 2
        // Predicated region
        $region49: #{tpu_custom_call.1} parent=47 // pred_check
          %p596 = pneg %p93
        $region50: #{tpu_custom_call.1} parent=47 // pred_check_branch
          %598 = sbr.rel (%p596) target = $region52
        $region51: #{tpu_custom_call.1} parent=47 // pred_region
          %p599 = scmp.lt.s32.totalorder %s28, 1
          %s600 = scalar_select %p599, %s28, 1
          %p601 = scmp.lt.s32.totalorder %s29, 0
          %s602 = scalar_select %p601, %s29, 0
          %s603 = smul.addr %s602, 7
          %s604 = smul.addr %s600, 7
          %s605 = sadd.s32 %s603, %s604
          %s606 = smul.addr %s605, 8
          %s607 = scalar_lea.vmem %s1, %s606
        $region52: #{tpu_custom_call.1} parent=47 // pred_fallthru
          _
        // Predicated region
        $region53: #{tpu_custom_call.1} parent=47 // pred_check
          %p608 = pneg %p121
        $region54: #{tpu_custom_call.1} parent=47 // pred_check_branch
          %610 = sbr.rel (%p608) target = $region56
        $region55: #{tpu_custom_call.1} parent=47 // pred_region
          %s611 = sand.u32 %s106, 1
          %s612 = scalar_lea.sflag [#allocation5], %s611
          %s613 = sand.u32 %s106, 1
          %s614 = smul.addr %s613, 2
          %s615 = scalar_lea.vmem [#allocation6], %s614
          %616 = dma.done %s612, 32
        $region56: #{tpu_custom_call.1} parent=47 // pred_fallthru
          _
      $region48: #{tpu_custom_call.1} parent=5 // pred_fallthru
        _
    $region6: #{tpu_custom_call.1} parent=1 // loop_footer
      %s19 = sadd.s32 1, %s15
    $region7: #{tpu_custom_call.1} parent=1 // loop_footer_branch
      %14 = sbr.rel target = $region3
    $region8: #{tpu_custom_call.1} parent=1 // loop_exit
      _
    %617 = vsyncpa [#allocation4], 1
    %s618 = scalar_lea.sflag [#allocation4], 1
    %619 = vsyncpa %s618, 1
    %620 = vsyncpa [#allocation5], 1
    %s621 = scalar_lea.sflag [#allocation5], 1
    %622 = vsyncpa %s621, 1

</llo_original>
